<compile_context>
chip_gen: v7x
topology: tpu7x:2x2x1
jax: 0.10.0
libtpu: 0.0.40
codegen_flags: <defaults>
</compile_context>

<pallas_src>
import functools

import jax
import jax.numpy as jnp
from jax.experimental import pallas as pl
from jax.experimental.pallas import tpu as pltpu

_LANE = 128      # TPU lane width (last-dim padding target)
_SUBLANE = 8


def _round_up(n, m):
    return ((n + m - 1) // m) * m


def _pad_to(a, shape):
    pads = [(0, t - s) for s, t in zip(a.shape, shape)]
    if all(p == (0, 0) for p in pads):
        return a
    return jnp.pad(a, pads)


def _apply_act(name: str, x):
    """Map a torch.nn activation class name to an elementwise op (f32 math)."""
    if name == "Identity":
        return x
    if name == "ReLU":
        return jnp.maximum(x, 0.0)
    if name == "Tanh":
        return jnp.tanh(x)
    if name == "Sigmoid":
        return jax.nn.sigmoid(x)
    if name == "GELU":
        # torch.nn.GELU defaults to the exact erf formulation.
        return jax.nn.gelu(x, approximate=False)
    if name == "SiLU":
        return jax.nn.silu(x)
    if name == "ELU":
        return jax.nn.elu(x)
    if name == "LeakyReLU":
        return jax.nn.leaky_relu(x, negative_slope=0.01)
    if name == "Softplus":
        return jax.nn.softplus(x)
    if name == "Softsign":
        return jax.nn.soft_sign(x)
    # TODO(synk): other torch.nn activation classes not mapped; raise instead
    # of silently falling back to identity (silent numerical divergence).
    raise ValueError(f"Unsupported activation: {name!r}")


def _mlp_kernel(x_ref, w_in_ref, b_in_ref, w_hid_ref, b_hid_ref,
                w_out_ref, b_out_ref, o_ref, *,
                num_hidden_layers: int, activation: str, out_activation: str,
                compute_dtype):
    # Input projection: (tb, I) @ (I, H) -> (tb, H), f32 accumulation.
    h = jnp.dot(x_ref[...], w_in_ref[...], preferred_element_type=jnp.float32)
    h = _apply_act(activation, h + b_in_ref[...])

    # Hidden layers, statically unrolled (num_hidden_layers is a Python const).
    for l in range(num_hidden_layers):
        h = jnp.dot(h.astype(compute_dtype), w_hid_ref[l],
                    preferred_element_type=jnp.float32)
        h = _apply_act(activation, h + b_hid_ref[l])

    # Output projection: (tb, H) @ (H, O) -> (tb, O).
    y = jnp.dot(h.astype(compute_dtype), w_out_ref[...],
                preferred_element_type=jnp.float32)
    y = _apply_act(out_activation, y + b_out_ref[...])
    o_ref[...] = y.astype(o_ref.dtype)


def mlp_forward(x, params, *, activation="ReLU", out_activation="Identity",
                num_hidden_layers=2, tb=128, compute_dtype=jnp.float32,
                weight_buffers=2):
    """Fused MLP forward.

    x: (B, input_size) float32.
    tb: batch tile (>=128 recommended; padded internally).
    compute_dtype: MXU operand dtype (float32 or bfloat16). Accumulation,
      biases and activations are always float32.
    weight_buffers: 1 to single-buffer the VMEM-resident weights (constant
      index_map => no double buffer needed; use on v7x at large hidden sizes).
    """
    out_dtype = x.dtype
    B, I = x.shape
    w_in, b_in = params["w_in"], params["b_in"]          # (I, H), (1, H)
    w_hid, b_hid = params["w_hid"], params["b_hid"]      # (L, H, H), (L, 1, H)
    w_out, b_out = params["w_out"], params["b_out"]      # (H, O), (1, O)
    H = w_in.shape[1]
    O = w_out.shape[1]
    L = int(num_hidden_layers)
    Lp = max(L, 1)

    # bf16 packs 16 rows per sublane group; keep the batch tile aligned.
    row_align = 16 if jnp.dtype(compute_dtype) == jnp.dtype(jnp.bfloat16) else _SUBLANE
    tb = max(row_align, _round_up(int(tb), row_align))

    # Lane-dense padding of every feature dim and the batch dim.
    I_p = _round_up(I, _LANE)
    H_p = _round_up(H, _LANE)
    O_p = _round_up(O, _LANE)
    B_p = _round_up(B, tb)

    x_p = _pad_to(x, (B_p, I_p)).astype(compute_dtype)
    w_in_p = _pad_to(w_in, (I_p, H_p)).astype(compute_dtype)
    b_in_p = _pad_to(b_in.reshape(1, H), (1, H_p)).astype(jnp.float32)
    if L == 0:
        # Keep ref shapes non-empty; the kernel never indexes them when L == 0.
        w_hid_p = jnp.zeros((1, H_p, H_p), compute_dtype)
        b_hid_p = jnp.zeros((1, 1, H_p), jnp.float32)
    else:
        w_hid_p = _pad_to(w_hid, (Lp, H_p, H_p)).astype(compute_dtype)
        b_hid_p = _pad_to(b_hid.reshape(Lp, 1, H), (Lp, 1, H_p)).astype(jnp.float32)
    w_out_p = _pad_to(w_out, (H_p, O_p)).astype(compute_dtype)
    b_out_p = _pad_to(b_out.reshape(1, O), (1, O_p)).astype(jnp.float32)

    grid = (B_p // tb,)

    def _const_spec(shape):
        idx = lambda i: tuple(0 for _ in shape)
        if weight_buffers == 2:
            return pl.BlockSpec(shape, idx)
        # Constant index_map -> no double-buffering needed; halves resident
        # weight footprint (matters under v7x's 64 MiB VMEM at large H).
        return pl.BlockSpec(shape, idx, pipeline_mode=pl.Buffered(weight_buffers))

    kernel = functools.partial(
        _mlp_kernel,
        num_hidden_layers=L,
        activation=activation,
        out_activation=out_activation,
        compute_dtype=compute_dtype,
    )

    # Explicit VMEM budget: resident weights (+biases), double-buffered x/out
    # tiles, and headroom for the f32 activation tile chain.
    w_item = jnp.dtype(compute_dtype).itemsize
    resident = weight_buffers * w_item * (I_p * H_p + Lp * H_p * H_p + H_p * O_p)
    resident += weight_buffers * 4 * (H_p + Lp * H_p + O_p)
    resident += 2 * tb * (I_p * w_item + O_p * jnp.dtype(out_dtype).itemsize)
    resident += 4 * tb * H_p * 4
    vmem_limit = int(min(max(2 * resident, 32 * 1024 * 1024), 100 * 1024 * 1024))

    out_p = pl.pallas_call(
        kernel,
        out_shape=jax.ShapeDtypeStruct((B_p, O_p), out_dtype),
        grid_spec=pltpu.PrefetchScalarGridSpec(
            num_scalar_prefetch=0,
            grid=grid,
            in_specs=[
                pl.BlockSpec((tb, I_p), lambda i: (i, 0)),   # x tile over batch
                _const_spec(w_in_p.shape),
                _const_spec(b_in_p.shape),
                _const_spec(w_hid_p.shape),
                _const_spec(b_hid_p.shape),
                _const_spec(w_out_p.shape),
                _const_spec(b_out_p.shape),
            ],
            out_specs=pl.BlockSpec((tb, O_p), lambda i: (i, 0)),
        ),
        compiler_params=pltpu.CompilerParams(
            dimension_semantics=("parallel",),
            vmem_limit_bytes=vmem_limit,
        ),
    )(x_p, w_in_p, b_in_p, w_hid_p, b_hid_p, w_out_p, b_out_p)

    return out_p[:B, :O]


def _ref_forward(x, params, *, activation, out_activation, num_hidden_layers):
    h = _apply_act(activation, x @ params["w_in"] + params["b_in"])
    for l in range(num_hidden_layers):
        h = _apply_act(activation, h @ params["w_hid"][l] + params["b_hid"][l])
    y = h @ params["w_out"] + params["b_out"]
    return _apply_act(out_activation, y)


def init_params(key, input_size, hidden_size, output_size, num_hidden_layers):
    ks = jax.random.split(key, 6)
    scale_in = 1.0 / jnp.sqrt(input_size)
    scale_h = 1.0 / jnp.sqrt(hidden_size)
    L = max(num_hidden_layers, 1)
    return {
        "w_in": jax.random.normal(ks[0], (input_size, hidden_size), jnp.float32) * scale_in,
        "b_in": jax.random.normal(ks[1], (1, hidden_size), jnp.float32) * scale_in,
        "w_hid": jax.random.normal(ks[2], (L, hidden_size, hidden_size), jnp.float32) * scale_h,
        "b_hid": jax.random.normal(ks[3], (L, 1, hidden_size), jnp.float32) * scale_h,
        "w_out": jax.random.normal(ks[4], (hidden_size, output_size), jnp.float32) * scale_h,
        "b_out": jax.random.normal(ks[5], (1, output_size), jnp.float32) * scale_h,
    }


if __name__ == "__main__":
    # Small shapes consistent with MLP(input_size, output_size, hidden_size,
    # activation, out_activation, num_hidden_layers).
    input_size, output_size, hidden_size = 32, 16, 32
    num_hidden_layers = 2
    activation, out_activation = "ReLU", "Identity"
    batch = 16

    key = jax.random.PRNGKey(0)
    kx, kp = jax.random.split(key)
    x = jax.random.normal(kx, (batch, input_size), jnp.float32)
    params = init_params(kp, input_size, hidden_size, output_size, num_hidden_layers)

    ref = _ref_forward(
        x, params,
        activation=activation,
        out_activation=out_activation,
        num_hidden_layers=num_hidden_layers,
    )

    # f32 MXU operands: bit-compatible with the f32 reference.
    out_f32 = jax.block_until_ready(mlp_forward(
        x, params,
        activation=activation, out_activation=out_activation,
        num_hidden_layers=num_hidden_layers, tb=128,
        compute_dtype=jnp.float32))
    assert out_f32.shape == (batch, output_size)
    assert jnp.allclose(out_f32, ref, atol=1e-4, rtol=1e-4), "f32 mismatch vs JAX reference"

    # bf16 MXU operands, f32 accumulate/epilogue (v6e/v7x fast path).
    out_bf16 = jax.block_until_ready(mlp_forward(
        x, params,
        activation=activation, out_activation=out_activation,
        num_hidden_layers=num_hidden_layers, tb=128,
        compute_dtype=jnp.bfloat16))
    assert out_bf16.shape == (batch, output_size)
    assert jnp.allclose(out_bf16, ref, atol=1e-1, rtol=1e-1), "bf16 mismatch vs JAX reference"

    print("KERNEL_OK")
</pallas_src>

<mosaic_0001>
module attributes {stable_mosaic.version = 11 : i64} {
  func.func @_mlp_kernel(%arg0: i32, %arg1: memref<128x128xf32, #tpu.memory_space<vmem>>, %arg2: memref<128x128xf32, #tpu.memory_space<vmem>>, %arg3: memref<1x128xf32, #tpu.memory_space<vmem>>, %arg4: memref<2x128x128xf32, #tpu.memory_space<vmem>>, %arg5: memref<2x1x128xf32, #tpu.memory_space<vmem>>, %arg6: memref<128x128xf32, #tpu.memory_space<vmem>>, %arg7: memref<1x128xf32, #tpu.memory_space<vmem>>, %arg8: memref<128x128xf32, #tpu.memory_space<vmem>>) attributes {dimension_semantics = [#tpu.dimension_semantics<parallel>], iteration_bounds = array<i64: 1>, scalar_prefetch = 0 : i64, scratch_operands = 0 : i64, tpu.core_type = #tpu.core_type<tc>, window_params = [{transform_indices = @transform_0, window_bounds = array<i64: 128, 128>}, {pipeline_mode = #tpu.pipeline_mode<synchronous>, transform_indices = @transform_1, window_bounds = array<i64: 128, 128>}, {pipeline_mode = #tpu.pipeline_mode<synchronous>, transform_indices = @transform_2, window_bounds = array<i64: 1, 128>}, {pipeline_mode = #tpu.pipeline_mode<synchronous>, transform_indices = @transform_3, window_bounds = array<i64: 2, 128, 128>}, {pipeline_mode = #tpu.pipeline_mode<synchronous>, transform_indices = @transform_4, window_bounds = array<i64: 2, 1, 128>}, {pipeline_mode = #tpu.pipeline_mode<synchronous>, transform_indices = @transform_5, window_bounds = array<i64: 128, 128>}, {pipeline_mode = #tpu.pipeline_mode<synchronous>, transform_indices = @transform_6, window_bounds = array<i64: 1, 128>}, {transform_indices = @transform_7, window_bounds = array<i64: 128, 128>}]} {
    %c0 = arith.constant 0 : index
    %c0_0 = arith.constant 0 : index
    %0 = vector.load %arg1[%c0, %c0_0] : memref<128x128xf32, #tpu.memory_space<vmem>>, vector<128x128xf32>
    %c0_1 = arith.constant 0 : index
    %c0_2 = arith.constant 0 : index
    %1 = vector.load %arg2[%c0_1, %c0_2] : memref<128x128xf32, #tpu.memory_space<vmem>>, vector<128x128xf32>
    %cst = arith.constant dense<0.000000e+00> : vector<128x128xf32>
    %2 = tpu.matmul %0, %1, %cst {dimension_numbers = #tpu.dot_dimension_numbers<[1], [0], [0], [1], [0, 0, 1, 1], [], []>} : vector<128x128xf32>, vector<128x128xf32>, vector<128x128xf32> -> vector<128x128xf32>
    %c0_3 = arith.constant 0 : index
    %c0_4 = arith.constant 0 : index
    %3 = vector.load %arg3[%c0_3, %c0_4] : memref<1x128xf32, #tpu.memory_space<vmem>>, vector<1x128xf32>
    %4 = vector.broadcast %3 : vector<1x128xf32> to vector<128x128xf32>
    %5 = arith.addf %2, %4 : vector<128x128xf32>
    %cst_5 = arith.constant 0.000000e+00 : f32
    %6 = vector.broadcast %cst_5 : f32 to vector<128x128xf32>
    %7 = arith.maximumf %5, %6 : vector<128x128xf32>
    %c0_6 = arith.constant 0 : index
    %c0_7 = arith.constant 0 : index
    %c0_8 = arith.constant 0 : index
    %8 = vector.load %arg4[%c0_6, %c0_7, %c0_8] : memref<2x128x128xf32, #tpu.memory_space<vmem>>, vector<1x128x128xf32>
    %9 = vector.shape_cast %8 : vector<1x128x128xf32> to vector<128x128xf32>
    %cst_9 = arith.constant dense<0.000000e+00> : vector<128x128xf32>
    %10 = tpu.matmul %7, %9, %cst_9 {dimension_numbers = #tpu.dot_dimension_numbers<[1], [0], [0], [1], [0, 0, 1, 1], [], []>} : vector<128x128xf32>, vector<128x128xf32>, vector<128x128xf32> -> vector<128x128xf32>
    %c0_10 = arith.constant 0 : index
    %c0_11 = arith.constant 0 : index
    %c0_12 = arith.constant 0 : index
    %11 = vector.load %arg5[%c0_10, %c0_11, %c0_12] : memref<2x1x128xf32, #tpu.memory_space<vmem>>, vector<1x1x128xf32>
    %12 = vector.shape_cast %11 : vector<1x1x128xf32> to vector<1x128xf32>
    %13 = vector.broadcast %12 : vector<1x128xf32> to vector<128x128xf32>
    %14 = arith.addf %10, %13 : vector<128x128xf32>
    %cst_13 = arith.constant 0.000000e+00 : f32
    %15 = vector.broadcast %cst_13 : f32 to vector<128x128xf32>
    %16 = arith.maximumf %14, %15 : vector<128x128xf32>
    %c1 = arith.constant 1 : index
    %c0_14 = arith.constant 0 : index
    %c0_15 = arith.constant 0 : index
    %17 = vector.load %arg4[%c1, %c0_14, %c0_15] : memref<2x128x128xf32, #tpu.memory_space<vmem>>, vector<1x128x128xf32>
    %18 = vector.shape_cast %17 : vector<1x128x128xf32> to vector<128x128xf32>
    %cst_16 = arith.constant dense<0.000000e+00> : vector<128x128xf32>
    %19 = tpu.matmul %16, %18, %cst_16 {dimension_numbers = #tpu.dot_dimension_numbers<[1], [0], [0], [1], [0, 0, 1, 1], [], []>} : vector<128x128xf32>, vector<128x128xf32>, vector<128x128xf32> -> vector<128x128xf32>
    %c1_17 = arith.constant 1 : index
    %c0_18 = arith.constant 0 : index
    %c0_19 = arith.constant 0 : index
    %20 = vector.load %arg5[%c1_17, %c0_18, %c0_19] : memref<2x1x128xf32, #tpu.memory_space<vmem>>, vector<1x1x128xf32>
    %21 = vector.shape_cast %20 : vector<1x1x128xf32> to vector<1x128xf32>
    %22 = vector.broadcast %21 : vector<1x128xf32> to vector<128x128xf32>
    %23 = arith.addf %19, %22 : vector<128x128xf32>
    %cst_20 = arith.constant 0.000000e+00 : f32
    %24 = vector.broadcast %cst_20 : f32 to vector<128x128xf32>
    %25 = arith.maximumf %23, %24 : vector<128x128xf32>
    %c0_21 = arith.constant 0 : index
    %c0_22 = arith.constant 0 : index
    %26 = vector.load %arg6[%c0_21, %c0_22] : memref<128x128xf32, #tpu.memory_space<vmem>>, vector<128x128xf32>
    %cst_23 = arith.constant dense<0.000000e+00> : vector<128x128xf32>
    %27 = tpu.matmul %25, %26, %cst_23 {dimension_numbers = #tpu.dot_dimension_numbers<[1], [0], [0], [1], [0, 0, 1, 1], [], []>} : vector<128x128xf32>, vector<128x128xf32>, vector<128x128xf32> -> vector<128x128xf32>
    %c0_24 = arith.constant 0 : index
    %c0_25 = arith.constant 0 : index
    %28 = vector.load %arg7[%c0_24, %c0_25] : memref<1x128xf32, #tpu.memory_space<vmem>>, vector<1x128xf32>
    %29 = vector.broadcast %28 : vector<1x128xf32> to vector<128x128xf32>
    %30 = arith.addf %27, %29 : vector<128x128xf32>
    %c0_26 = arith.constant 0 : index
    %c0_27 = arith.constant 0 : index
    %31 = vector.load %arg8[%c0_26, %c0_27] : memref<128x128xf32, #tpu.memory_space<vmem>>, vector<128x128xf32>
    tpu.vector_store %arg8[%c0_26, %c0_27], %30 {strides = array<i32>} : memref<128x128xf32, #tpu.memory_space<vmem>>, vector<128x128xf32>,
    return
  }
  func.func @transform_0(%arg0: i32) -> (i32, i32) {
    %c0_i32 = arith.constant 0 : i32
    %c0_i32_0 = arith.constant 0 : i32
    return %arg0, %c0_i32 : i32, i32
  }
  func.func @transform_1(%arg0: i32) -> (i32, i32) {
    %c0_i32 = arith.constant 0 : i32
    %c0_i32_0 = arith.constant 0 : i32
    %c0_i32_1 = arith.constant 0 : i32
    return %c0_i32, %c0_i32_0 : i32, i32
  }
  func.func @transform_2(%arg0: i32) -> (i32, i32) {
    %c0_i32 = arith.constant 0 : i32
    %c0_i32_0 = arith.constant 0 : i32
    %c0_i32_1 = arith.constant 0 : i32
    return %c0_i32, %c0_i32_0 : i32, i32
  }
  func.func @transform_3(%arg0: i32) -> (i32, i32, i32) {
    %c0_i32 = arith.constant 0 : i32
    %c0_i32_0 = arith.constant 0 : i32
    %c0_i32_1 = arith.constant 0 : i32
    %c0_i32_2 = arith.constant 0 : i32
    return %c0_i32, %c0_i32_0, %c0_i32_1 : i32, i32, i32
  }
  func.func @transform_4(%arg0: i32) -> (i32, i32, i32) {
    %c0_i32 = arith.constant 0 : i32
    %c0_i32_0 = arith.constant 0 : i32
    %c0_i32_1 = arith.constant 0 : i32
    %c0_i32_2 = arith.constant 0 : i32
    return %c0_i32, %c0_i32_0, %c0_i32_1 : i32, i32, i32
  }
  func.func @transform_5(%arg0: i32) -> (i32, i32) {
    %c0_i32 = arith.constant 0 : i32
    %c0_i32_0 = arith.constant 0 : i32
    %c0_i32_1 = arith.constant 0 : i32
    return %c0_i32, %c0_i32_0 : i32, i32
  }
  func.func @transform_6(%arg0: i32) -> (i32, i32) {
    %c0_i32 = arith.constant 0 : i32
    %c0_i32_0 = arith.constant 0 : i32
    %c0_i32_1 = arith.constant 0 : i32
    return %c0_i32, %c0_i32_0 : i32, i32
  }
  func.func @transform_7(%arg0: i32) -> (i32, i32) {
    %c0_i32 = arith.constant 0 : i32
    %c0_i32_0 = arith.constant 0 : i32
    return %arg0, %c0_i32 : i32, i32
  }
}

</mosaic_0001>

<llo_original>
// kernel: tpu_custom_call.1
$region0: #{tpu_custom_call.1}
  #allocation0 [shape = 'u32[]', space=smem, size = 0x4, offset = 0x4, fixed_abs, tag = 'smem constant byte address 0x4 - core index']
  #allocation1 [shape = 'u32[144,128]{1,0:T(1,128)}', space=vmem, size = 0x12000, scoped, tag = 'internal scratch']
  %s0 = inlined_call_operand.hbm [shape: f32[128,128], index: 0, kind: input, shape index: {}]
  %s1 = inlined_call_operand.hbm [shape: f32[128,128], index: 1, kind: input, shape index: {}]
  %s2 = inlined_call_operand.vmem [shape: f32[1,128], index: 2, kind: input, shape index: {}]
  %s3 = inlined_call_operand.hbm [shape: f32[2,128,128], index: 3, kind: input, shape index: {}]
  %s4 = inlined_call_operand.vmem [shape: f32[2,1,128], index: 4, kind: input, shape index: {}]
  %s5 = inlined_call_operand.hbm [shape: f32[128,128], index: 5, kind: input, shape index: {}]
  %s6 = inlined_call_operand.vmem [shape: f32[1,128], index: 6, kind: input, shape index: {}]
  %s7 = inlined_call_operand.hbm [shape: f32[128,128], index: 7, kind: output, shape index: {}]
  %s8 = sld [smem:[#allocation0]]
  $region54: #{tpu_custom_call.1} parent=0
    _
  %s10 = ssub.s32 1, %s8
  %s11 = scalar_select 0, %s10, %s8
  $region1: #{tpu_custom_call.1} parent=0
    #allocation2 [shape = 'u8[65536]{0}', space=vmem, size = 0x10000, scoped, tag = 'input window, operand 0, single buffered']
    #allocation3 [shape = 's32[1]{0}', space=sflag, size = 0x4, scoped, tag = 'scoped memory for tpu_custom_call.1']
    #allocation4 [shape = 's32[1]{0}', space=sflag, size = 0x4, scoped, tag = 'scoped memory for tpu_custom_call.1']
    #allocation5 [shape = 'u8[65536]{0}', space=vmem, size = 0x10000, scoped, tag = 'input window, operand 1, single buffered']
    #allocation6 [shape = 's32[1]{0}', space=sflag, size = 0x4, scoped, tag = 'scoped memory for tpu_custom_call.1']
    #allocation7 [shape = 'u8[131072]{0}', space=vmem, size = 0x20000, scoped, tag = 'input window, operand 3, single buffered']
    #allocation8 [shape = 'u8[65536]{0}', space=vmem, size = 0x10000, scoped, tag = 'input window, operand 5, single buffered']
    #allocation9 [shape = 's32[1]{0}', space=sflag, size = 0x4, scoped, tag = 'scoped memory for tpu_custom_call.1']
    #allocation10 [shape = 'u8[65536]{0}', space=vmem, size = 0x10000, scoped, tag = 'output window, operand 0, single buffered']
    %12 = vsyncpa [#allocation3], 0
    %13 = vsyncpa [#allocation6], 0
    %14 = vsyncpa [#allocation9], 0
    %15 = vsyncpa [#allocation4], 0
    // Predicated region
    $region2: #{tpu_custom_call.1} parent=1 // pred_check
      _
    $region3: #{tpu_custom_call.1} parent=1 // pred_check_branch
      %17 = sbr.rel (0) target = $region5
    $region4: #{tpu_custom_call.1} parent=1 // pred_region
      %s19 = ssub.s32 2048, 2048
      %20 = vsyncadd [#allocation3], %s19
      %s21 = sshll.u32 [#allocation2], 4
      %s22 = int_to_ptr.vmem [resolvable:$true] %s21
      %27 = dma.hbm_to_vmem [thread:$0]  %s0, 2048, %s22, [#allocation3], 128, 128, 8
    $region5: #{tpu_custom_call.1} parent=1 // pred_fallthru
      _
    // Predicated region
    $region6: #{tpu_custom_call.1} parent=1 // pred_check
      _
    $region7: #{tpu_custom_call.1} parent=1 // pred_check_branch
      %29 = sbr.rel (0) target = $region9
    $region8: #{tpu_custom_call.1} parent=1 // pred_region
      %s31 = ssub.s32 2048, 2048
      %32 = vsyncadd [#allocation6], %s31
      %s33 = sshll.u32 [#allocation5], 4
      %s34 = int_to_ptr.vmem [resolvable:$true] %s33
      %39 = dma.hbm_to_vmem [thread:$0]  %s1, 2048, %s34, [#allocation6], 128, 128, 8
    $region9: #{tpu_custom_call.1} parent=1 // pred_fallthru
      _
    // Predicated region
    $region10: #{tpu_custom_call.1} parent=1 // pred_check
      _
    $region11: #{tpu_custom_call.1} parent=1 // pred_check_branch
      %41 = sbr.rel (0) target = $region13
    $region12: #{tpu_custom_call.1} parent=1 // pred_region
      _
    $region13: #{tpu_custom_call.1} parent=1 // pred_fallthru
      _
    // Predicated region
    $region14: #{tpu_custom_call.1} parent=1 // pred_check
      _
    $region15: #{tpu_custom_call.1} parent=1 // pred_check_branch
      %43 = sbr.rel (0) target = $region17
    $region16: #{tpu_custom_call.1} parent=1 // pred_region
      %s45 = ssub.s32 4096, 4096
      %46 = vsyncadd [#allocation6], %s45
      %s47 = sshll.u32 [#allocation7], 4
      %s48 = int_to_ptr.vmem [resolvable:$true] %s47
      %53 = dma.hbm_to_vmem [thread:$0]  %s3, 4096, %s48, [#allocation6], 128, 128, 8
    $region17: #{tpu_custom_call.1} parent=1 // pred_fallthru
      _
    // Predicated region
    $region18: #{tpu_custom_call.1} parent=1 // pred_check
      _
    $region19: #{tpu_custom_call.1} parent=1 // pred_check_branch
      %55 = sbr.rel (0) target = $region21
    $region20: #{tpu_custom_call.1} parent=1 // pred_region
      _
    $region21: #{tpu_custom_call.1} parent=1 // pred_fallthru
      _
    // Predicated region
    $region22: #{tpu_custom_call.1} parent=1 // pred_check
      _
    $region23: #{tpu_custom_call.1} parent=1 // pred_check_branch
      %57 = sbr.rel (0) target = $region25
    $region24: #{tpu_custom_call.1} parent=1 // pred_region
      %s59 = ssub.s32 2048, 2048
      %60 = vsyncadd [#allocation9], %s59
      %s61 = sshll.u32 [#allocation8], 4
      %s62 = int_to_ptr.vmem [resolvable:$true] %s61
      %67 = dma.hbm_to_vmem [thread:$0]  %s5, 2048, %s62, [#allocation9], 128, 128, 8
    $region25: #{tpu_custom_call.1} parent=1 // pred_fallthru
      _
    // Predicated region
    $region26: #{tpu_custom_call.1} parent=1 // pred_check
      _
    $region27: #{tpu_custom_call.1} parent=1 // pred_check_branch
      %69 = sbr.rel (0) target = $region29
    $region28: #{tpu_custom_call.1} parent=1 // pred_region
      _
    $region29: #{tpu_custom_call.1} parent=1 // pred_fallthru
      _
    // Predicated region
    $region30: #{tpu_custom_call.1} parent=1 // pred_check
      _
    $region31: #{tpu_custom_call.1} parent=1 // pred_check_branch
      %71 = sbr.rel (0) target = $region33
    $region32: #{tpu_custom_call.1} parent=1 // pred_region
      %72 = dma.done [#allocation3], 2048
    $region33: #{tpu_custom_call.1} parent=1 // pred_fallthru
      _
    // Predicated region
    $region34: #{tpu_custom_call.1} parent=1 // pred_check
      _
    $region35: #{tpu_custom_call.1} parent=1 // pred_check_branch
      %74 = sbr.rel (0) target = $region37
    $region36: #{tpu_custom_call.1} parent=1 // pred_region
      %75 = dma.done [#allocation6], 2048
    $region37: #{tpu_custom_call.1} parent=1 // pred_fallthru
      _
    // Predicated region
    $region38: #{tpu_custom_call.1} parent=1 // pred_check
      _
    $region39: #{tpu_custom_call.1} parent=1 // pred_check_branch
      %77 = sbr.rel (0) target = $region41
    $region40: #{tpu_custom_call.1} parent=1 // pred_region
      %78 = dma.done [#allocation6], 4096
    $region41: #{tpu_custom_call.1} parent=1 // pred_fallthru
      _
    // Predicated region
    $region42: #{tpu_custom_call.1} parent=1 // pred_check
      _
    $region43: #{tpu_custom_call.1} parent=1 // pred_check_branch
      %80 = sbr.rel (0) target = $region45
    $region44: #{tpu_custom_call.1} parent=1 // pred_region
      %81 = dma.done [#allocation9], 2048
    $region45: #{tpu_custom_call.1} parent=1 // pred_fallthru
      _
    %v82 = vld [vmem:[#allocation2] sm:$0xff]
    %v83 = vld [vmem:[#allocation2 + $0x8] sm:$0xff]
    %v84 = vld [vmem:[#allocation2 + $0x10] sm:$0xff]
    %v85 = vld [vmem:[#allocation2 + $0x18] sm:$0xff]
    %v86 = vld [vmem:[#allocation2 + $0x20] sm:$0xff]
    %v87 = vld [vmem:[#allocation2 + $0x28] sm:$0xff]
    %v88 = vld [vmem:[#allocation2 + $0x30] sm:$0xff]
    %v89 = vld [vmem:[#allocation2 + $0x38] sm:$0xff]
    %v90 = vld [vmem:[#allocation2 + $0x40] sm:$0xff]
    %v91 = vld [vmem:[#allocation2 + $0x48] sm:$0xff]
    %v92 = vld [vmem:[#allocation2 + $0x50] sm:$0xff]
    %v93 = vld [vmem:[#allocation2 + $0x58] sm:$0xff]
    %v94 = vld [vmem:[#allocation2 + $0x60] sm:$0xff]
    %v95 = vld [vmem:[#allocation2 + $0x68] sm:$0xff]
    %v96 = vld [vmem:[#allocation2 + $0x70] sm:$0xff]
    %v97 = vld [vmem:[#allocation2 + $0x78] sm:$0xff]
    %v98 = vld [vmem:[#allocation5] sm:$0xff]
    %v99 = vld [vmem:[#allocation5 + $0x8] sm:$0xff]
    %v100 = vld [vmem:[#allocation5 + $0x10] sm:$0xff]
    %v101 = vld [vmem:[#allocation5 + $0x18] sm:$0xff]
    %v102 = vld [vmem:[#allocation5 + $0x20] sm:$0xff]
    %v103 = vld [vmem:[#allocation5 + $0x28] sm:$0xff]
    %v104 = vld [vmem:[#allocation5 + $0x30] sm:$0xff]
    %v105 = vld [vmem:[#allocation5 + $0x38] sm:$0xff]
    %v106 = vld [vmem:[#allocation5 + $0x40] sm:$0xff]
    %v107 = vld [vmem:[#allocation5 + $0x48] sm:$0xff]
    %v108 = vld [vmem:[#allocation5 + $0x50] sm:$0xff]
    %v109 = vld [vmem:[#allocation5 + $0x58] sm:$0xff]
    %v110 = vld [vmem:[#allocation5 + $0x60] sm:$0xff]
    %v111 = vld [vmem:[#allocation5 + $0x68] sm:$0xff]
    %v112 = vld [vmem:[#allocation5 + $0x70] sm:$0xff]
    %v113 = vld [vmem:[#allocation5 + $0x78] sm:$0xff]
    %v114 = vld [vmem:[%s2] sm:$0x1]
    %v116 = vlaneseq
    %v117 = vshrl.u32 %v116, 7
    %v118 = vsub.s32 0, %v117
    %v119 = vrot.slane %v114, %v118
    %121 = vmatprep.subr.mxu0 0.0
    %122 = vmatpush1.msra.mxu0 %v98
    %123 = vmatprep.subr.mxu0 0.0
    %124 = vmatpush1.msra.mxu0 %v99
    %125 = vmatprep.subr.mxu0 0.0
    %126 = vmatpush1.msra.mxu0 %v100
    %127 = vmatprep.subr.mxu0 0.0
    %128 = vmatpush1.msra.mxu0 %v101
    %129 = vmatprep.subr.mxu0 0.0
    %130 = vmatpush1.msra.mxu0 %v102
    %131 = vmatprep.subr.mxu0 0.0
    %132 = vmatpush1.msra.mxu0 %v103
    %133 = vmatprep.subr.mxu0 0.0
    %134 = vmatpush1.msra.mxu0 %v104
    %135 = vmatprep.subr.mxu0 0.0
    %136 = vmatpush1.msra.mxu0 %v105
    %137 = vmatprep.subr.mxu0 0.0
    %138 = vmatpush1.msra.mxu0 %v106
    %139 = vmatprep.subr.mxu0 0.0
    %140 = vmatpush1.msra.mxu0 %v107
    %141 = vmatprep.subr.mxu0 0.0
    %142 = vmatpush1.msra.mxu0 %v108
    %143 = vmatprep.subr.mxu0 0.0
    %144 = vmatpush1.msra.mxu0 %v109
    %145 = vmatprep.subr.mxu0 0.0
    %146 = vmatpush1.msra.mxu0 %v110
    %147 = vmatprep.subr.mxu0 0.0
    %148 = vmatpush1.msra.mxu0 %v111
    %149 = vmatprep.subr.mxu0 0.0
    %150 = vmatpush1.msra.mxu0 %v112
    %151 = vmatprep.subr.mxu0 0.0
    %152 = vmatpush1.msra.mxu0 %v113
    %153 = vmatprep.subr.mxu0 0.0
    %154 = vmatpush1.msra.mxu0 0.0
    %155 = vmatprep.subr.mxu0 0.0
    %156 = vmatpush1.msra.mxu0 0.0
    %157 = vmatprep.subr.mxu0 0.0
    %158 = vmatpush1.msra.mxu0 0.0
    %159 = vmatprep.subr.mxu0 0.0
    %160 = vmatpush1.msra.mxu0 0.0
    %161 = vmatprep.subr.mxu0 0.0
    %162 = vmatpush1.msra.mxu0 0.0
    %163 = vmatprep.subr.mxu0 0.0
    %164 = vmatpush1.msra.mxu0 0.0
    %165 = vmatprep.subr.mxu0 0.0
    %166 = vmatpush1.msra.mxu0 0.0
    %167 = vmatprep.subr.mxu0 0.0
    %168 = vmatpush1.msra.mxu0 0.0
    %169 = vmatprep.subr.mxu0 0.0
    %170 = vmatpush1.msra.mxu0 0.0
    %171 = vmatprep.subr.mxu0 0.0
    %172 = vmatpush1.msra.mxu0 0.0
    %173 = vmatprep.subr.mxu0 0.0
    %174 = vmatpush1.msra.mxu0 0.0
    %175 = vmatprep.subr.mxu0 0.0
    %176 = vmatpush1.msra.mxu0 0.0
    %177 = vmatprep.subr.mxu0 0.0
    %178 = vmatpush1.msra.mxu0 0.0
    %179 = vmatprep.subr.mxu0 0.0
    %180 = vmatpush1.msra.mxu0 0.0
    %181 = vmatprep.subr.mxu0 0.0
    %182 = vmatpush1.msra.mxu0 0.0
    %183 = vmatprep.subr.mxu0 0.0
    %184 = vmatpush1.msra.mxu0 0.0
    %185 = vmatprep.mubr.f32.mxu0 0.0
    %186 = vmatmul.mubr.f32.gmra.mrb[0].mxu0 %v82
    %v187 = vpop.f32.mrb[0].mxu0
    %v188 = vadd.f32 %v119, %v187
    %v189 = vpop.f32.mrb[0].mxu0
    %190 = vmatprep.mubr.f32.mxu0 0.0
    %191 = vmatmul.mubr.f32.gmra.mrb[0].mxu0 %v83
    %v192 = vpop.f32.mrb[0].mxu0
    %v193 = vadd.f32 %v119, %v192
    %v194 = vpop.f32.mrb[0].mxu0
    %195 = vmatprep.mubr.f32.mxu0 0.0
    %196 = vmatmul.mubr.f32.gmra.mrb[0].mxu0 %v84
    %v197 = vpop.f32.mrb[0].mxu0
    %v198 = vadd.f32 %v119, %v197
    %v199 = vpop.f32.mrb[0].mxu0
    %200 = vmatprep.mubr.f32.mxu0 0.0
    %201 = vmatmul.mubr.f32.gmra.mrb[0].mxu0 %v85
    %v202 = vpop.f32.mrb[0].mxu0
    %v203 = vadd.f32 %v119, %v202
    %v204 = vpop.f32.mrb[0].mxu0
    %205 = vmatprep.mubr.f32.mxu0 0.0
    %206 = vmatmul.mubr.f32.gmra.mrb[0].mxu0 %v86
    %v207 = vpop.f32.mrb[0].mxu0
    %v208 = vadd.f32 %v119, %v207
    %v209 = vpop.f32.mrb[0].mxu0
    %210 = vmatprep.mubr.f32.mxu0 0.0
    %211 = vmatmul.mubr.f32.gmra.mrb[0].mxu0 %v87
    %v212 = vpop.f32.mrb[0].mxu0
    %v213 = vadd.f32 %v119, %v212
    %v214 = vpop.f32.mrb[0].mxu0
    %215 = vmatprep.mubr.f32.mxu0 0.0
    %216 = vmatmul.mubr.f32.gmra.mrb[0].mxu0 %v88
    %v217 = vpop.f32.mrb[0].mxu0
    %v218 = vadd.f32 %v119, %v217
    %v219 = vpop.f32.mrb[0].mxu0
    %220 = vmatprep.mubr.f32.mxu0 0.0
    %221 = vmatmul.mubr.f32.gmra.mrb[0].mxu0 %v89
    %v222 = vpop.f32.mrb[0].mxu0
    %v223 = vadd.f32 %v119, %v222
    %v224 = vpop.f32.mrb[0].mxu0
    %225 = vmatprep.mubr.f32.mxu0 0.0
    %226 = vmatmul.mubr.f32.gmra.mrb[0].mxu0 %v90
    %v227 = vpop.f32.mrb[0].mxu0
    %v228 = vadd.f32 %v119, %v227
    %v229 = vpop.f32.mrb[0].mxu0
    %230 = vmatprep.mubr.f32.mxu0 0.0
    %231 = vmatmul.mubr.f32.gmra.mrb[0].mxu0 %v91
    %v232 = vpop.f32.mrb[0].mxu0
    %v233 = vadd.f32 %v119, %v232
    %v234 = vpop.f32.mrb[0].mxu0
    %235 = vmatprep.mubr.f32.mxu0 0.0
    %236 = vmatmul.mubr.f32.gmra.mrb[0].mxu0 %v92
    %v237 = vpop.f32.mrb[0].mxu0
    %v238 = vadd.f32 %v119, %v237
    %v239 = vpop.f32.mrb[0].mxu0
    %240 = vmatprep.mubr.f32.mxu0 0.0
    %241 = vmatmul.mubr.f32.gmra.mrb[0].mxu0 %v93
    %v242 = vpop.f32.mrb[0].mxu0
    %v243 = vadd.f32 %v119, %v242
    %v244 = vpop.f32.mrb[0].mxu0
    %245 = vmatprep.mubr.f32.mxu0 0.0
    %246 = vmatmul.mubr.f32.gmra.mrb[0].mxu0 %v94
    %v247 = vpop.f32.mrb[0].mxu0
    %v248 = vadd.f32 %v119, %v247
    %v249 = vpop.f32.mrb[0].mxu0
    %250 = vmatprep.mubr.f32.mxu0 0.0
    %251 = vmatmul.mubr.f32.gmra.mrb[0].mxu0 %v95
    %v252 = vpop.f32.mrb[0].mxu0
    %v253 = vadd.f32 %v119, %v252
    %v254 = vpop.f32.mrb[0].mxu0
    %255 = vmatprep.mubr.f32.mxu0 0.0
    %256 = vmatmul.mubr.f32.gmra.mrb[0].mxu0 %v96
    %v257 = vpop.f32.mrb[0].mxu0
    %v258 = vadd.f32 %v119, %v257
    %v259 = vpop.f32.mrb[0].mxu0
    %260 = vmatprep.mubr.f32.mxu0 0.0
    %261 = vmatmul.mubr.f32.gmra.mrb[0].mxu0 %v97
    %v262 = vpop.f32.mrb[0].mxu0
    %v263 = vadd.f32 %v119, %v262
    %v264 = vpop.f32.mrb[0].mxu0
    %265 = vdwg.mxu0
    %v266 = vmax.f32 %v188, 0.0
    %v267 = vmax.f32 %v193, 0.0
    %v268 = vmax.f32 %v198, 0.0
    %v269 = vmax.f32 %v203, 0.0
    %v270 = vmax.f32 %v208, 0.0
    %v271 = vmax.f32 %v213, 0.0
    %v272 = vmax.f32 %v218, 0.0
    %v273 = vmax.f32 %v223, 0.0
    %v274 = vmax.f32 %v228, 0.0
    %v275 = vmax.f32 %v233, 0.0
    %v276 = vmax.f32 %v238, 0.0
    %v277 = vmax.f32 %v243, 0.0
    %v278 = vmax.f32 %v248, 0.0
    %v279 = vmax.f32 %v253, 0.0
    %v280 = vmax.f32 %v258, 0.0
    %v281 = vmax.f32 %v263, 0.0
    %v282 = vld [vmem:[#allocation7] sm:$0xff]
    %v283 = vld [vmem:[#allocation7 + $0x8] sm:$0xff]
    %v284 = vld [vmem:[#allocation7 + $0x10] sm:$0xff]
    %v285 = vld [vmem:[#allocation7 + $0x18] sm:$0xff]
    %v286 = vld [vmem:[#allocation7 + $0x20] sm:$0xff]
    %v287 = vld [vmem:[#allocation7 + $0x28] sm:$0xff]
    %v288 = vld [vmem:[#allocation7 + $0x30] sm:$0xff]
    %v289 = vld [vmem:[#allocation7 + $0x38] sm:$0xff]
    %v290 = vld [vmem:[#allocation7 + $0x40] sm:$0xff]
    %v291 = vld [vmem:[#allocation7 + $0x48] sm:$0xff]
    %v292 = vld [vmem:[#allocation7 + $0x50] sm:$0xff]
    %v293 = vld [vmem:[#allocation7 + $0x58] sm:$0xff]
    %v294 = vld [vmem:[#allocation7 + $0x60] sm:$0xff]
    %v295 = vld [vmem:[#allocation7 + $0x68] sm:$0xff]
    %v296 = vld [vmem:[#allocation7 + $0x70] sm:$0xff]
    %v297 = vld [vmem:[#allocation7 + $0x78] sm:$0xff]
    %v298 = vld [vmem:[%s4] sm:$0x1]
    %v300 = vlaneseq
    %v301 = vshrl.u32 %v300, 7
    %v302 = vsub.s32 0, %v301
    %v303 = vrot.slane %v298, %v302
    %305 = vmatprep.subr.mxu0 0.0
    %306 = vmatpush1.msra.mxu0 %v282
    %307 = vmatprep.subr.mxu0 0.0
    %308 = vmatpush1.msra.mxu0 %v283
    %309 = vmatprep.subr.mxu0 0.0
    %310 = vmatpush1.msra.mxu0 %v284
    %311 = vmatprep.subr.mxu0 0.0
    %312 = vmatpush1.msra.mxu0 %v285
    %313 = vmatprep.subr.mxu0 0.0
    %314 = vmatpush1.msra.mxu0 %v286
    %315 = vmatprep.subr.mxu0 0.0
    %316 = vmatpush1.msra.mxu0 %v287
    %317 = vmatprep.subr.mxu0 0.0
    %318 = vmatpush1.msra.mxu0 %v288
    %319 = vmatprep.subr.mxu0 0.0
    %320 = vmatpush1.msra.mxu0 %v289
    %321 = vmatprep.subr.mxu0 0.0
    %322 = vmatpush1.msra.mxu0 %v290
    %323 = vmatprep.subr.mxu0 0.0
    %324 = vmatpush1.msra.mxu0 %v291
    %325 = vmatprep.subr.mxu0 0.0
    %326 = vmatpush1.msra.mxu0 %v292
    %327 = vmatprep.subr.mxu0 0.0
    %328 = vmatpush1.msra.mxu0 %v293
    %329 = vmatprep.subr.mxu0 0.0
    %330 = vmatpush1.msra.mxu0 %v294
    %331 = vmatprep.subr.mxu0 0.0
    %332 = vmatpush1.msra.mxu0 %v295
    %333 = vmatprep.subr.mxu0 0.0
    %334 = vmatpush1.msra.mxu0 %v296
    %335 = vmatprep.subr.mxu0 0.0
    %336 = vmatpush1.msra.mxu0 %v297
    %337 = vmatprep.subr.mxu0 0.0
    %338 = vmatpush1.msra.mxu0 0.0
    %339 = vmatprep.subr.mxu0 0.0
    %340 = vmatpush1.msra.mxu0 0.0
    %341 = vmatprep.subr.mxu0 0.0
    %342 = vmatpush1.msra.mxu0 0.0
    %343 = vmatprep.subr.mxu0 0.0
    %344 = vmatpush1.msra.mxu0 0.0
    %345 = vmatprep.subr.mxu0 0.0
    %346 = vmatpush1.msra.mxu0 0.0
    %347 = vmatprep.subr.mxu0 0.0
    %348 = vmatpush1.msra.mxu0 0.0
    %349 = vmatprep.subr.mxu0 0.0
    %350 = vmatpush1.msra.mxu0 0.0
    %351 = vmatprep.subr.mxu0 0.0
    %352 = vmatpush1.msra.mxu0 0.0
    %353 = vmatprep.subr.mxu0 0.0
    %354 = vmatpush1.msra.mxu0 0.0
    %355 = vmatprep.subr.mxu0 0.0
    %356 = vmatpush1.msra.mxu0 0.0
    %357 = vmatprep.subr.mxu0 0.0
    %358 = vmatpush1.msra.mxu0 0.0
    %359 = vmatprep.subr.mxu0 0.0
    %360 = vmatpush1.msra.mxu0 0.0
    %361 = vmatprep.subr.mxu0 0.0
    %362 = vmatpush1.msra.mxu0 0.0
    %363 = vmatprep.subr.mxu0 0.0
    %364 = vmatpush1.msra.mxu0 0.0
    %365 = vmatprep.subr.mxu0 0.0
    %366 = vmatpush1.msra.mxu0 0.0
    %367 = vmatprep.subr.mxu0 0.0
    %368 = vmatpush1.msra.mxu0 0.0
    %369 = vmatprep.mubr.f32.mxu0 0.0
    %370 = vmatmul.mubr.f32.gmra.mrb[0].mxu0 %v266
    %v371 = vpop.f32.mrb[0].mxu0
    %v372 = vadd.f32 %v303, %v371
    %v373 = vpop.f32.mrb[0].mxu0
    %374 = vmatprep.mubr.f32.mxu0 0.0
    %375 = vmatmul.mubr.f32.gmra.mrb[0].mxu0 %v267
    %v376 = vpop.f32.mrb[0].mxu0
    %v377 = vadd.f32 %v303, %v376
    %v378 = vpop.f32.mrb[0].mxu0
    %379 = vmatprep.mubr.f32.mxu0 0.0
    %380 = vmatmul.mubr.f32.gmra.mrb[0].mxu0 %v268
    %v381 = vpop.f32.mrb[0].mxu0
    %v382 = vadd.f32 %v303, %v381
    %v383 = vpop.f32.mrb[0].mxu0
    %384 = vmatprep.mubr.f32.mxu0 0.0
    %385 = vmatmul.mubr.f32.gmra.mrb[0].mxu0 %v269
    %v386 = vpop.f32.mrb[0].mxu0
    %v387 = vadd.f32 %v303, %v386
    %v388 = vpop.f32.mrb[0].mxu0
    %389 = vmatprep.mubr.f32.mxu0 0.0
    %390 = vmatmul.mubr.f32.gmra.mrb[0].mxu0 %v270
    %v391 = vpop.f32.mrb[0].mxu0
    %v392 = vadd.f32 %v303, %v391
    %v393 = vpop.f32.mrb[0].mxu0
    %394 = vmatprep.mubr.f32.mxu0 0.0
    %395 = vmatmul.mubr.f32.gmra.mrb[0].mxu0 %v271
    %v396 = vpop.f32.mrb[0].mxu0
    %v397 = vadd.f32 %v303, %v396
    %v398 = vpop.f32.mrb[0].mxu0
    %399 = vmatprep.mubr.f32.mxu0 0.0
    %400 = vmatmul.mubr.f32.gmra.mrb[0].mxu0 %v272
    %v401 = vpop.f32.mrb[0].mxu0
    %v402 = vadd.f32 %v303, %v401
    %v403 = vpop.f32.mrb[0].mxu0
    %404 = vmatprep.mubr.f32.mxu0 0.0
    %405 = vmatmul.mubr.f32.gmra.mrb[0].mxu0 %v273
    %v406 = vpop.f32.mrb[0].mxu0
    %v407 = vadd.f32 %v303, %v406
    %v408 = vpop.f32.mrb[0].mxu0
    %409 = vmatprep.mubr.f32.mxu0 0.0
    %410 = vmatmul.mubr.f32.gmra.mrb[0].mxu0 %v274
    %v411 = vpop.f32.mrb[0].mxu0
    %v412 = vadd.f32 %v303, %v411
    %v413 = vpop.f32.mrb[0].mxu0
    %414 = vmatprep.mubr.f32.mxu0 0.0
    %415 = vmatmul.mubr.f32.gmra.mrb[0].mxu0 %v275
    %v416 = vpop.f32.mrb[0].mxu0
    %v417 = vadd.f32 %v303, %v416
    %v418 = vpop.f32.mrb[0].mxu0
    %419 = vmatprep.mubr.f32.mxu0 0.0
    %420 = vmatmul.mubr.f32.gmra.mrb[0].mxu0 %v276
    %v421 = vpop.f32.mrb[0].mxu0
    %v422 = vadd.f32 %v303, %v421
    %v423 = vpop.f32.mrb[0].mxu0
    %424 = vmatprep.mubr.f32.mxu0 0.0
    %425 = vmatmul.mubr.f32.gmra.mrb[0].mxu0 %v277
    %v426 = vpop.f32.mrb[0].mxu0
    %v427 = vadd.f32 %v303, %v426
    %v428 = vpop.f32.mrb[0].mxu0
    %429 = vmatprep.mubr.f32.mxu0 0.0
    %430 = vmatmul.mubr.f32.gmra.mrb[0].mxu0 %v278
    %v431 = vpop.f32.mrb[0].mxu0
    %v432 = vadd.f32 %v303, %v431
    %v433 = vpop.f32.mrb[0].mxu0
    %434 = vmatprep.mubr.f32.mxu0 0.0
    %435 = vmatmul.mubr.f32.gmra.mrb[0].mxu0 %v279
    %v436 = vpop.f32.mrb[0].mxu0
    %v437 = vadd.f32 %v303, %v436
    %v438 = vpop.f32.mrb[0].mxu0
    %439 = vmatprep.mubr.f32.mxu0 0.0
    %440 = vmatmul.mubr.f32.gmra.mrb[0].mxu0 %v280
    %v441 = vpop.f32.mrb[0].mxu0
    %v442 = vadd.f32 %v303, %v441
    %v443 = vpop.f32.mrb[0].mxu0
    %444 = vmatprep.mubr.f32.mxu0 0.0
    %445 = vmatmul.mubr.f32.gmra.mrb[0].mxu0 %v281
    %v446 = vpop.f32.mrb[0].mxu0
    %v447 = vadd.f32 %v303, %v446
    %v448 = vpop.f32.mrb[0].mxu0
    %449 = vdwg.mxu0
    %v450 = vmax.f32 %v372, 0.0
    %v451 = vmax.f32 %v377, 0.0
    %v452 = vmax.f32 %v382, 0.0
    %v453 = vmax.f32 %v387, 0.0
    %v454 = vmax.f32 %v392, 0.0
    %v455 = vmax.f32 %v397, 0.0
    %v456 = vmax.f32 %v402, 0.0
    %v457 = vmax.f32 %v407, 0.0
    %v458 = vmax.f32 %v412, 0.0
    %v459 = vmax.f32 %v417, 0.0
    %v460 = vmax.f32 %v422, 0.0
    %v461 = vmax.f32 %v427, 0.0
    %v462 = vmax.f32 %v432, 0.0
    %v463 = vmax.f32 %v437, 0.0
    %v464 = vmax.f32 %v442, 0.0
    %v465 = vmax.f32 %v447, 0.0
    %s466 = scalar_lea.vmem [#allocation7], 128
    %v467 = vld [vmem:[%s466] sm:$0xff]
    %v468 = vld [vmem:[%s466 + $0x8] sm:$0xff]
    %v469 = vld [vmem:[%s466 + $0x10] sm:$0xff]
    %v470 = vld [vmem:[%s466 + $0x18] sm:$0xff]
    %v471 = vld [vmem:[%s466 + $0x20] sm:$0xff]
    %v472 = vld [vmem:[%s466 + $0x28] sm:$0xff]
    %v473 = vld [vmem:[%s466 + $0x30] sm:$0xff]
    %v474 = vld [vmem:[%s466 + $0x38] sm:$0xff]
    %v475 = vld [vmem:[%s466 + $0x40] sm:$0xff]
    %v476 = vld [vmem:[%s466 + $0x48] sm:$0xff]
    %v477 = vld [vmem:[%s466 + $0x50] sm:$0xff]
    %v478 = vld [vmem:[%s466 + $0x58] sm:$0xff]
    %v479 = vld [vmem:[%s466 + $0x60] sm:$0xff]
    %v480 = vld [vmem:[%s466 + $0x68] sm:$0xff]
    %v481 = vld [vmem:[%s466 + $0x70] sm:$0xff]
    %v482 = vld [vmem:[%s466 + $0x78] sm:$0xff]
    %s483 = scalar_lea.vmem %s4, 1
    %v484 = vld [vmem:[%s483] sm:$0x1]
    %v486 = vlaneseq
    %v487 = vshrl.u32 %v486, 7
    %v488 = vsub.s32 0, %v487
    %v489 = vrot.slane %v484, %v488
    %491 = vmatprep.subr.mxu0 0.0
    %492 = vmatpush1.msra.mxu0 %v467
    %493 = vmatprep.subr.mxu0 0.0
    %494 = vmatpush1.msra.mxu0 %v468
    %495 = vmatprep.subr.mxu0 0.0
    %496 = vmatpush1.msra.mxu0 %v469
    %497 = vmatprep.subr.mxu0 0.0
    %498 = vmatpush1.msra.mxu0 %v470
    %499 = vmatprep.subr.mxu0 0.0
    %500 = vmatpush1.msra.mxu0 %v471
    %501 = vmatprep.subr.mxu0 0.0
    %502 = vmatpush1.msra.mxu0 %v472
    %503 = vmatprep.subr.mxu0 0.0
    %504 = vmatpush1.msra.mxu0 %v473
    %505 = vmatprep.subr.mxu0 0.0
    %506 = vmatpush1.msra.mxu0 %v474
    %507 = vmatprep.subr.mxu0 0.0
    %508 = vmatpush1.msra.mxu0 %v475
    %509 = vmatprep.subr.mxu0 0.0
    %510 = vmatpush1.msra.mxu0 %v476
    %511 = vmatprep.subr.mxu0 0.0
    %512 = vmatpush1.msra.mxu0 %v477
    %513 = vmatprep.subr.mxu0 0.0
    %514 = vmatpush1.msra.mxu0 %v478
    %515 = vmatprep.subr.mxu0 0.0
    %516 = vmatpush1.msra.mxu0 %v479
    %517 = vmatprep.subr.mxu0 0.0
    %518 = vmatpush1.msra.mxu0 %v480
    %519 = vmatprep.subr.mxu0 0.0
    %520 = vmatpush1.msra.mxu0 %v481
    %521 = vmatprep.subr.mxu0 0.0
    %522 = vmatpush1.msra.mxu0 %v482
    %523 = vmatprep.subr.mxu0 0.0
    %524 = vmatpush1.msra.mxu0 0.0
    %525 = vmatprep.subr.mxu0 0.0
    %526 = vmatpush1.msra.mxu0 0.0
    %527 = vmatprep.subr.mxu0 0.0
    %528 = vmatpush1.msra.mxu0 0.0
    %529 = vmatprep.subr.mxu0 0.0
    %530 = vmatpush1.msra.mxu0 0.0
    %531 = vmatprep.subr.mxu0 0.0
    %532 = vmatpush1.msra.mxu0 0.0
    %533 = vmatprep.subr.mxu0 0.0
    %534 = vmatpush1.msra.mxu0 0.0
    %535 = vmatprep.subr.mxu0 0.0
    %536 = vmatpush1.msra.mxu0 0.0
    %537 = vmatprep.subr.mxu0 0.0
    %538 = vmatpush1.msra.mxu0 0.0
    %539 = vmatprep.subr.mxu0 0.0
    %540 = vmatpush1.msra.mxu0 0.0
    %541 = vmatprep.subr.mxu0 0.0
    %542 = vmatpush1.msra.mxu0 0.0
    %543 = vmatprep.subr.mxu0 0.0
    %544 = vmatpush1.msra.mxu0 0.0
    %545 = vmatprep.subr.mxu0 0.0
    %546 = vmatpush1.msra.mxu0 0.0
    %547 = vmatprep.subr.mxu0 0.0
    %548 = vmatpush1.msra.mxu0 0.0
    %549 = vmatprep.subr.mxu0 0.0
    %550 = vmatpush1.msra.mxu0 0.0
    %551 = vmatprep.subr.mxu0 0.0
    %552 = vmatpush1.msra.mxu0 0.0
    %553 = vmatprep.subr.mxu0 0.0
    %554 = vmatpush1.msra.mxu0 0.0
    %555 = vmatprep.mubr.f32.mxu0 0.0
    %556 = vmatmul.mubr.f32.gmra.mrb[0].mxu0 %v450
    %v557 = vpop.f32.mrb[0].mxu0
    %v558 = vadd.f32 %v489, %v557
    %v559 = vpop.f32.mrb[0].mxu0
    %560 = vmatprep.mubr.f32.mxu0 0.0
    %561 = vmatmul.mubr.f32.gmra.mrb[0].mxu0 %v451
    %v562 = vpop.f32.mrb[0].mxu0
    %v563 = vadd.f32 %v489, %v562
    %v564 = vpop.f32.mrb[0].mxu0
    %565 = vmatprep.mubr.f32.mxu0 0.0
    %566 = vmatmul.mubr.f32.gmra.mrb[0].mxu0 %v452
    %v567 = vpop.f32.mrb[0].mxu0
    %v568 = vadd.f32 %v489, %v567
    %v569 = vpop.f32.mrb[0].mxu0
    %570 = vmatprep.mubr.f32.mxu0 0.0
    %571 = vmatmul.mubr.f32.gmra.mrb[0].mxu0 %v453
    %v572 = vpop.f32.mrb[0].mxu0
    %v573 = vadd.f32 %v489, %v572
    %v574 = vpop.f32.mrb[0].mxu0
    %575 = vmatprep.mubr.f32.mxu0 0.0
    %576 = vmatmul.mubr.f32.gmra.mrb[0].mxu0 %v454
    %v577 = vpop.f32.mrb[0].mxu0
    %v578 = vadd.f32 %v489, %v577
    %v579 = vpop.f32.mrb[0].mxu0
    %580 = vmatprep.mubr.f32.mxu0 0.0
    %581 = vmatmul.mubr.f32.gmra.mrb[0].mxu0 %v455
    %v582 = vpop.f32.mrb[0].mxu0
    %v583 = vadd.f32 %v489, %v582
    %v584 = vpop.f32.mrb[0].mxu0
    %585 = vmatprep.mubr.f32.mxu0 0.0
    %586 = vmatmul.mubr.f32.gmra.mrb[0].mxu0 %v456
    %v587 = vpop.f32.mrb[0].mxu0
    %v588 = vadd.f32 %v489, %v587
    %v589 = vpop.f32.mrb[0].mxu0
    %590 = vmatprep.mubr.f32.mxu0 0.0
    %591 = vmatmul.mubr.f32.gmra.mrb[0].mxu0 %v457
    %v592 = vpop.f32.mrb[0].mxu0
    %v593 = vadd.f32 %v489, %v592
    %v594 = vpop.f32.mrb[0].mxu0
    %595 = vmatprep.mubr.f32.mxu0 0.0
    %596 = vmatmul.mubr.f32.gmra.mrb[0].mxu0 %v458
    %v597 = vpop.f32.mrb[0].mxu0
    %v598 = vadd.f32 %v489, %v597
    %v599 = vpop.f32.mrb[0].mxu0
    %600 = vmatprep.mubr.f32.mxu0 0.0
    %601 = vmatmul.mubr.f32.gmra.mrb[0].mxu0 %v459
    %v602 = vpop.f32.mrb[0].mxu0
    %v603 = vadd.f32 %v489, %v602
    %v604 = vpop.f32.mrb[0].mxu0
    %605 = vmatprep.mubr.f32.mxu0 0.0
    %606 = vmatmul.mubr.f32.gmra.mrb[0].mxu0 %v460
    %v607 = vpop.f32.mrb[0].mxu0
    %v608 = vadd.f32 %v489, %v607
    %v609 = vpop.f32.mrb[0].mxu0
    %610 = vmatprep.mubr.f32.mxu0 0.0
    %611 = vmatmul.mubr.f32.gmra.mrb[0].mxu0 %v461
    %v612 = vpop.f32.mrb[0].mxu0
    %v613 = vadd.f32 %v489, %v612
    %v614 = vpop.f32.mrb[0].mxu0
    %615 = vmatprep.mubr.f32.mxu0 0.0
    %616 = vmatmul.mubr.f32.gmra.mrb[0].mxu0 %v462
    %v617 = vpop.f32.mrb[0].mxu0
    %v618 = vadd.f32 %v489, %v617
    %v619 = vpop.f32.mrb[0].mxu0
    %620 = vmatprep.mubr.f32.mxu0 0.0
    %621 = vmatmul.mubr.f32.gmra.mrb[0].mxu0 %v463
    %v622 = vpop.f32.mrb[0].mxu0
    %v623 = vadd.f32 %v489, %v622
    %v624 = vpop.f32.mrb[0].mxu0
    %625 = vmatprep.mubr.f32.mxu0 0.0
    %626 = vmatmul.mubr.f32.gmra.mrb[0].mxu0 %v464
    %v627 = vpop.f32.mrb[0].mxu0
    %v628 = vadd.f32 %v489, %v627
    %v629 = vpop.f32.mrb[0].mxu0
    %630 = vmatprep.mubr.f32.mxu0 0.0
    %631 = vmatmul.mubr.f32.gmra.mrb[0].mxu0 %v465
    %v632 = vpop.f32.mrb[0].mxu0
    %v633 = vadd.f32 %v489, %v632
    %v634 = vpop.f32.mrb[0].mxu0
    %635 = vdwg.mxu0
    %v636 = vmax.f32 %v558, 0.0
    %v637 = vmax.f32 %v563, 0.0
    %v638 = vmax.f32 %v568, 0.0
    %v639 = vmax.f32 %v573, 0.0
    %v640 = vmax.f32 %v578, 0.0
    %v641 = vmax.f32 %v583, 0.0
    %v642 = vmax.f32 %v588, 0.0
    %v643 = vmax.f32 %v593, 0.0
    %v644 = vmax.f32 %v598, 0.0
    %v645 = vmax.f32 %v603, 0.0
    %v646 = vmax.f32 %v608, 0.0
    %v647 = vmax.f32 %v613, 0.0
    %v648 = vmax.f32 %v618, 0.0
    %v649 = vmax.f32 %v623, 0.0
    %v650 = vmax.f32 %v628, 0.0
    %v651 = vmax.f32 %v633, 0.0
    %v652 = vld [vmem:[#allocation8] sm:$0xff]
    %v653 = vld [vmem:[#allocation8 + $0x8] sm:$0xff]
    %v654 = vld [vmem:[#allocation8 + $0x10] sm:$0xff]
    %v655 = vld [vmem:[#allocation8 + $0x18] sm:$0xff]
    %v656 = vld [vmem:[#allocation8 + $0x20] sm:$0xff]
    %v657 = vld [vmem:[#allocation8 + $0x28] sm:$0xff]
    %v658 = vld [vmem:[#allocation8 + $0x30] sm:$0xff]
    %v659 = vld [vmem:[#allocation8 + $0x38] sm:$0xff]
    %v660 = vld [vmem:[#allocation8 + $0x40] sm:$0xff]
    %v661 = vld [vmem:[#allocation8 + $0x48] sm:$0xff]
    %v662 = vld [vmem:[#allocation8 + $0x50] sm:$0xff]
    %v663 = vld [vmem:[#allocation8 + $0x58] sm:$0xff]
    %v664 = vld [vmem:[#allocation8 + $0x60] sm:$0xff]
    %v665 = vld [vmem:[#allocation8 + $0x68] sm:$0xff]
    %v666 = vld [vmem:[#allocation8 + $0x70] sm:$0xff]
    %v667 = vld [vmem:[#allocation8 + $0x78] sm:$0xff]
    %v668 = vld [vmem:[%s6] sm:$0x1]
    %v670 = vlaneseq
    %v671 = vshrl.u32 %v670, 7
    %v672 = vsub.s32 0, %v671
    %v673 = vrot.slane %v668, %v672
    %675 = vmatprep.subr.mxu0 0.0
    %676 = vmatpush1.msra.mxu0 %v652
    %677 = vmatprep.subr.mxu0 0.0
    %678 = vmatpush1.msra.mxu0 %v653
    %679 = vmatprep.subr.mxu0 0.0
    %680 = vmatpush1.msra.mxu0 %v654
    %681 = vmatprep.subr.mxu0 0.0
    %682 = vmatpush1.msra.mxu0 %v655
    %683 = vmatprep.subr.mxu0 0.0
    %684 = vmatpush1.msra.mxu0 %v656
    %685 = vmatprep.subr.mxu0 0.0
    %686 = vmatpush1.msra.mxu0 %v657
    %687 = vmatprep.subr.mxu0 0.0
    %688 = vmatpush1.msra.mxu0 %v658
    %689 = vmatprep.subr.mxu0 0.0
    %690 = vmatpush1.msra.mxu0 %v659
    %691 = vmatprep.subr.mxu0 0.0
    %692 = vmatpush1.msra.mxu0 %v660
    %693 = vmatprep.subr.mxu0 0.0
    %694 = vmatpush1.msra.mxu0 %v661
    %695 = vmatprep.subr.mxu0 0.0
    %696 = vmatpush1.msra.mxu0 %v662
    %697 = vmatprep.subr.mxu0 0.0
    %698 = vmatpush1.msra.mxu0 %v663
    %699 = vmatprep.subr.mxu0 0.0
    %700 = vmatpush1.msra.mxu0 %v664
    %701 = vmatprep.subr.mxu0 0.0
    %702 = vmatpush1.msra.mxu0 %v665
    %703 = vmatprep.subr.mxu0 0.0
    %704 = vmatpush1.msra.mxu0 %v666
    %705 = vmatprep.subr.mxu0 0.0
    %706 = vmatpush1.msra.mxu0 %v667
    %707 = vmatprep.subr.mxu0 0.0
    %708 = vmatpush1.msra.mxu0 0.0
    %709 = vmatprep.subr.mxu0 0.0
    %710 = vmatpush1.msra.mxu0 0.0
    %711 = vmatprep.subr.mxu0 0.0
    %712 = vmatpush1.msra.mxu0 0.0
    %713 = vmatprep.subr.mxu0 0.0
    %714 = vmatpush1.msra.mxu0 0.0
    %715 = vmatprep.subr.mxu0 0.0
    %716 = vmatpush1.msra.mxu0 0.0
    %717 = vmatprep.subr.mxu0 0.0
    %718 = vmatpush1.msra.mxu0 0.0
    %719 = vmatprep.subr.mxu0 0.0
    %720 = vmatpush1.msra.mxu0 0.0
    %721 = vmatprep.subr.mxu0 0.0
    %722 = vmatpush1.msra.mxu0 0.0
    %723 = vmatprep.subr.mxu0 0.0
    %724 = vmatpush1.msra.mxu0 0.0
    %725 = vmatprep.subr.mxu0 0.0
    %726 = vmatpush1.msra.mxu0 0.0
    %727 = vmatprep.subr.mxu0 0.0
    %728 = vmatpush1.msra.mxu0 0.0
    %729 = vmatprep.subr.mxu0 0.0
    %730 = vmatpush1.msra.mxu0 0.0
    %731 = vmatprep.subr.mxu0 0.0
    %732 = vmatpush1.msra.mxu0 0.0
    %733 = vmatprep.subr.mxu0 0.0
    %734 = vmatpush1.msra.mxu0 0.0
    %735 = vmatprep.subr.mxu0 0.0
    %736 = vmatpush1.msra.mxu0 0.0
    %737 = vmatprep.subr.mxu0 0.0
    %738 = vmatpush1.msra.mxu0 0.0
    %739 = vmatprep.mubr.f32.mxu0 0.0
    %740 = vmatmul.mubr.f32.gmra.mrb[0].mxu0 %v636
    %v741 = vpop.f32.mrb[0].mxu0
    %v742 = vadd.f32 %v673, %v741
    %v743 = vpop.f32.mrb[0].mxu0
    %744 = vmatprep.mubr.f32.mxu0 0.0
    %745 = vmatmul.mubr.f32.gmra.mrb[0].mxu0 %v637
    %v746 = vpop.f32.mrb[0].mxu0
    %v747 = vadd.f32 %v673, %v746
    %v748 = vpop.f32.mrb[0].mxu0
    %749 = vmatprep.mubr.f32.mxu0 0.0
    %750 = vmatmul.mubr.f32.gmra.mrb[0].mxu0 %v638
    %v751 = vpop.f32.mrb[0].mxu0
    %v752 = vadd.f32 %v673, %v751
    %v753 = vpop.f32.mrb[0].mxu0
    %754 = vmatprep.mubr.f32.mxu0 0.0
    %755 = vmatmul.mubr.f32.gmra.mrb[0].mxu0 %v639
    %v756 = vpop.f32.mrb[0].mxu0
    %v757 = vadd.f32 %v673, %v756
    %v758 = vpop.f32.mrb[0].mxu0
    %759 = vmatprep.mubr.f32.mxu0 0.0
    %760 = vmatmul.mubr.f32.gmra.mrb[0].mxu0 %v640
    %v761 = vpop.f32.mrb[0].mxu0
    %v762 = vadd.f32 %v673, %v761
    %v763 = vpop.f32.mrb[0].mxu0
    %764 = vmatprep.mubr.f32.mxu0 0.0
    %765 = vmatmul.mubr.f32.gmra.mrb[0].mxu0 %v641
    %v766 = vpop.f32.mrb[0].mxu0
    %v767 = vadd.f32 %v673, %v766
    %v768 = vpop.f32.mrb[0].mxu0
    %769 = vmatprep.mubr.f32.mxu0 0.0
    %770 = vmatmul.mubr.f32.gmra.mrb[0].mxu0 %v642
    %v771 = vpop.f32.mrb[0].mxu0
    %v772 = vadd.f32 %v673, %v771
    %v773 = vpop.f32.mrb[0].mxu0
    %774 = vmatprep.mubr.f32.mxu0 0.0
    %775 = vmatmul.mubr.f32.gmra.mrb[0].mxu0 %v643
    %v776 = vpop.f32.mrb[0].mxu0
    %v777 = vadd.f32 %v673, %v776
    %v778 = vpop.f32.mrb[0].mxu0
    %779 = vmatprep.mubr.f32.mxu0 0.0
    %780 = vmatmul.mubr.f32.gmra.mrb[0].mxu0 %v644
    %v781 = vpop.f32.mrb[0].mxu0
    %v782 = vadd.f32 %v673, %v781
    %v783 = vpop.f32.mrb[0].mxu0
    %784 = vmatprep.mubr.f32.mxu0 0.0
    %785 = vmatmul.mubr.f32.gmra.mrb[0].mxu0 %v645
    %v786 = vpop.f32.mrb[0].mxu0
    %v787 = vadd.f32 %v673, %v786
    %v788 = vpop.f32.mrb[0].mxu0
    %789 = vmatprep.mubr.f32.mxu0 0.0
    %790 = vmatmul.mubr.f32.gmra.mrb[0].mxu0 %v646
    %v791 = vpop.f32.mrb[0].mxu0
    %v792 = vadd.f32 %v673, %v791
    %v793 = vpop.f32.mrb[0].mxu0
    %794 = vmatprep.mubr.f32.mxu0 0.0
    %795 = vmatmul.mubr.f32.gmra.mrb[0].mxu0 %v647
    %v796 = vpop.f32.mrb[0].mxu0
    %v797 = vadd.f32 %v673, %v796
    %v798 = vpop.f32.mrb[0].mxu0
    %799 = vmatprep.mubr.f32.mxu0 0.0
    %800 = vmatmul.mubr.f32.gmra.mrb[0].mxu0 %v648
    %v801 = vpop.f32.mrb[0].mxu0
    %v802 = vadd.f32 %v673, %v801
    %v803 = vpop.f32.mrb[0].mxu0
    %804 = vmatprep.mubr.f32.mxu0 0.0
    %805 = vmatmul.mubr.f32.gmra.mrb[0].mxu0 %v649
    %v806 = vpop.f32.mrb[0].mxu0
    %v807 = vadd.f32 %v673, %v806
    %v808 = vpop.f32.mrb[0].mxu0
    %809 = vmatprep.mubr.f32.mxu0 0.0
    %810 = vmatmul.mubr.f32.gmra.mrb[0].mxu0 %v650
    %v811 = vpop.f32.mrb[0].mxu0
    %v812 = vadd.f32 %v673, %v811
    %v813 = vpop.f32.mrb[0].mxu0
    %814 = vmatprep.mubr.f32.mxu0 0.0
    %815 = vmatmul.mubr.f32.gmra.mrb[0].mxu0 %v651
    %v816 = vpop.f32.mrb[0].mxu0
    %v817 = vadd.f32 %v673, %v816
    %v818 = vpop.f32.mrb[0].mxu0
    %819 = vdwg.mxu0
    %820 = vst [vmem:[#allocation10] sm:$0xff] %v742
    %821 = vst [vmem:[#allocation10 + $0x8] sm:$0xff] %v747
    %822 = vst [vmem:[#allocation10 + $0x10] sm:$0xff] %v752
    %823 = vst [vmem:[#allocation10 + $0x18] sm:$0xff] %v757
    %824 = vst [vmem:[#allocation10 + $0x20] sm:$0xff] %v762
    %825 = vst [vmem:[#allocation10 + $0x28] sm:$0xff] %v767
    %826 = vst [vmem:[#allocation10 + $0x30] sm:$0xff] %v772
    %827 = vst [vmem:[#allocation10 + $0x38] sm:$0xff] %v777
    %828 = vst [vmem:[#allocation10 + $0x40] sm:$0xff] %v782
    %829 = vst [vmem:[#allocation10 + $0x48] sm:$0xff] %v787
    %830 = vst [vmem:[#allocation10 + $0x50] sm:$0xff] %v792
    %831 = vst [vmem:[#allocation10 + $0x58] sm:$0xff] %v797
    %832 = vst [vmem:[#allocation10 + $0x60] sm:$0xff] %v802
    %833 = vst [vmem:[#allocation10 + $0x68] sm:$0xff] %v807
    %834 = vst [vmem:[#allocation10 + $0x70] sm:$0xff] %v812
    %835 = vst [vmem:[#allocation10 + $0x78] sm:$0xff] %v817
    // Predicated region
    $region46: #{tpu_custom_call.1} parent=1 // pred_check
      _
    $region47: #{tpu_custom_call.1} parent=1 // pred_check_branch
      %837 = sbr.rel (0) target = $region49
    $region48: #{tpu_custom_call.1} parent=1 // pred_region
      %s839 = ssub.s32 2048, 2048
      %840 = vsyncadd [#allocation4], %s839
      %s841 = sshll.u32 [#allocation10], 4
      %s842 = int_to_ptr.vmem [resolvable:$true] %s841
      %847 = dma.vmem_to_hbm [thread:$0]  %s842, 2048, %s7, [#allocation4], 128, 128, 8
    $region49: #{tpu_custom_call.1} parent=1 // pred_fallthru
      _
    // Predicated region
    $region50: #{tpu_custom_call.1} parent=1 // pred_check
      _
    $region51: #{tpu_custom_call.1} parent=1 // pred_check_branch
      %849 = sbr.rel (0) target = $region53
    $region52: #{tpu_custom_call.1} parent=1 // pred_region
      %850 = dma.done [#allocation4], 2048
    $region53: #{tpu_custom_call.1} parent=1 // pred_fallthru
      _
    %851 = vsyncpa [#allocation3], 1
    %852 = vsyncpa [#allocation6], 1
    %853 = vsyncpa [#allocation9], 1
    %854 = vsyncpa [#allocation4], 1

</llo_original>
